<compile_context>
chip_gen: v5e
topology: v5e:2x2
jax: 0.10.0
libtpu: 0.0.40
codegen_flags: <defaults>
</compile_context>

<pallas_src>
import math

import jax
import jax.numpy as jnp
from jax.experimental import pallas as pl
from jax.experimental.pallas import tpu as pltpu


# ---------------------------------------------------------------------------
# Host-side trainable-parameter count (exact, arbitrary precision, cached).
# This mirrors summary()/__str__ of the PyTorch BaseModel; it is a host
# constant, so no device kernel is used for it.
# ---------------------------------------------------------------------------
def host_param_count(param_shapes):
    total = 0
    for shape in param_shapes:
        total += math.prod(int(d) for d in shape)
    return total


# ---------------------------------------------------------------------------
# Pallas kernel: single HBM->HBM DMA copy (stand-in for the abstract forward
# data path that a concrete subclass such as the UPerNet decoder would supply).
# Both refs live in HBM (memory_space=pl.ANY); the DMA engine moves the bytes,
# so arbitrary (including ragged) shapes work with zero wrapper-side ops.
# ---------------------------------------------------------------------------
def _hbm_copy_kernel(x_hbm, o_hbm, sem):
    cp = pltpu.make_async_copy(x_hbm, o_hbm, sem)
    cp.start()
    cp.wait()


# Below this size the fixed Pallas launch cost dominates; identity semantics
# let us simply return the input (per perf review).
_MIN_PALLAS_BYTES = 256 * 1024


def pallas_identity(x, *, force_kernel=False):
    """Identity pass-through of a tensor via a single HBM->HBM DMA.

    - No host-side pad / reshape / slice: the array is copied in its native
      layout, so non-multiple-of-(8,128) shapes incur no extra HBM passes.
    - Tiny tensors skip the kernel launch entirely (identity => return x),
      unless `force_kernel=True`.
    """
    nbytes = x.size * x.dtype.itemsize
    if not force_kernel and nbytes < _MIN_PALLAS_BYTES:
        return x

    return pl.pallas_call(
        _hbm_copy_kernel,
        out_shape=jax.ShapeDtypeStruct(x.shape, x.dtype),
        in_specs=[pl.BlockSpec(memory_space=pl.ANY)],
        out_specs=pl.BlockSpec(memory_space=pl.ANY),
        scratch_shapes=[pltpu.SemaphoreType.DMA],
        cost_estimate=pl.CostEstimate(
            flops=0, transcendentals=0, bytes_accessed=2 * nbytes
        ),
    )(x)


# ---------------------------------------------------------------------------
# JAX/Pallas mirror of the PyTorch BaseModel
# ---------------------------------------------------------------------------
class BaseModel:
    def __init__(self):
        # BaseModel registers no trainable parameters in PyTorch; mirror that.
        self._param_shapes = []          # shape tuples of trainable params
        self._nbr_params_cache = None

    def register_param_shapes(self, shapes):
        """Subclasses register their trainable-parameter shapes here."""
        self._param_shapes = list(shapes)
        self._nbr_params_cache = None

    def forward(self, *args, **kwargs):
        # TODO(synk): forward is abstract in the reference module; concrete
        # subclasses (UPerNet decoder etc.) supply the actual compute.
        raise NotImplementedError

    def _nbr_params(self):
        if self._nbr_params_cache is None:
            self._nbr_params_cache = host_param_count(self._param_shapes)
        return self._nbr_params_cache

    def summary(self):
        print(f"Nbr of trainable parameters: {self._nbr_params()}")

    def __str__(self):
        return (f"{self.__class__.__name__}()\n"
                f"Nbr of trainable parameters: {self._nbr_params()}")


if __name__ == "__main__":
    key = jax.random.PRNGKey(0)
    # Small NCHW input consistent with what a decoder subclass would consume.
    x = jax.random.normal(key, (2, 4, 16, 16), dtype=jnp.float32)

    model = BaseModel()

    # forward() must raise NotImplementedError, exactly like the PyTorch base.
    raised = False
    try:
        model.forward(x)
    except NotImplementedError:
        raised = True
    assert raised, "BaseModel.forward must raise NotImplementedError"

    # Parameter count: BaseModel has 0 params; host sum is exact and cached.
    assert model._nbr_params() == 0

    # Host count matches math.prod/sum on a synthetic list (and handles counts
    # far beyond int32 without overflow).
    synth_shapes = [(4, 3, 3, 3), (4,), (8, 4, 1, 1), (8,), (65536, 65536)]
    expected = sum(math.prod(s) for s in synth_shapes)
    assert host_param_count(synth_shapes) == expected

    # Identity data-path kernel (stand-in for the abstract forward).
    # Force the Pallas launch so the TPU kernel is actually exercised; the
    # default path would early-out for a tensor this small.
    y = jax.block_until_ready(pallas_identity(x, force_kernel=True))
    assert y.shape == x.shape and y.dtype == x.dtype
    assert bool(jnp.allclose(y, x))

    # Ragged (non-multiple-of-(8,128)) shape: no pad/slice round-trips needed.
    x_odd = jax.random.normal(jax.random.PRNGKey(0), (2, 3, 17, 19),
                              dtype=jnp.float32)
    y_odd = jax.block_until_ready(pallas_identity(x_odd, force_kernel=True))
    assert y_odd.shape == x_odd.shape
    assert bool(jnp.allclose(y_odd, x_odd))

    # Default path: tiny tensors skip the Pallas launch entirely (identity).
    y_fast = pallas_identity(x)
    assert y_fast is x

    print("KERNEL_OK")
</pallas_src>

<mosaic_0001>
module attributes {stable_mosaic.version = 11 : i64} {
  func.func @_hbm_copy_kernel(%arg0: memref<2x4x16x16xf32, #tpu.memory_space<any>>, %arg1: memref<2x4x16x16xf32, #tpu.memory_space<any>>, %arg2: memref<!tpu.dma_semaphore, #tpu.memory_space<semaphore_mem>>) attributes {dimension_semantics = [], scalar_prefetch = 0 : i64, scratch_operands = 1 : i64, tpu.core_type = #tpu.core_type<tc>} {
    tpu.enqueue_dma source(%arg0 : memref<2x4x16x16xf32, #tpu.memory_space<any>>) target(%arg1 : memref<2x4x16x16xf32, #tpu.memory_space<any>>) target_semaphore(%arg2 : memref<!tpu.dma_semaphore, #tpu.memory_space<semaphore_mem>>)
    tpu.wait_dma2 semaphore(%arg2 : memref<!tpu.dma_semaphore, #tpu.memory_space<semaphore_mem>>) src(%arg0 : memref<2x4x16x16xf32, #tpu.memory_space<any>>) dst(%arg1 : memref<2x4x16x16xf32, #tpu.memory_space<any>>)
    return
  }
}

</mosaic_0001>

<llo_original>
// kernel: tpu_custom_call.1
$region0: #{tpu_custom_call.1}
  #allocation0 [shape = 'u32[]', space=smem, size = 0x4, offset = 0x4, fixed_abs, tag = 'smem constant byte address 0x4 - core index']
  #allocation1 [shape = 'u32[72,128]{1,0:T(1,128)}', space=vmem, size = 0x9000, scoped, tag = 'internal scratch']
  #allocation2 [shape = 's32[1]{0}', space=sflag, size = 0x4, scoped, tag = 'scratch operand']
  #allocation3 [shape = 's32[]', space=sflag, size = 0x4, offset = 0, fixed_abs, tag = 'sflag constant byte address 0x0 - dummy sync flag']
  #allocation4 [shape = 'u32[0]{0}', space=smem, size = 0, offset = 0, fixed_abs, tag = 'smem constant byte address 0x0 - null']
  %s0 = inlined_call_operand.hbm [shape: f32[2,4,16,16], index: 0, kind: input, shape index: {}]
  %s1 = inlined_call_operand.hbm [shape: f32[2,4,16,16], index: 1, kind: output, shape index: {}]
  %s2 = sld [smem:[#allocation0]]
  $region2: #{tpu_custom_call.1} parent=0
    _
  %s4 = ssub.s32 1, %s2
  %s5 = scalar_select 0, %s4, %s2
  %s7 = sshll.u32 1, 14
  %s8 = sxor.u32 4294967295, %s7
  %s10 = sshll.u32 %s0, 4
  %s11 = int_to_ptr.hbm [resolvable:$true] %s10
  %s12 = sshll.u32 %s1, 4
  %s13 = int_to_ptr.hbm [resolvable:$true] %s12
  %16 = dma.general %s11, 2048, %s13, [#allocation2], [#allocation3], [#allocation4], 0, 0
  %s17 = smul.u32 2, 4
  %s18 = smul.u32 %s17, 16
  %s19 = smul.u32 %s18, 1
  %s20 = sshll.u32 %s19, 4
  %21 = dma.done [#allocation2], %s20
  %22 = vsyncmov [#allocation2]
  %s23 = vpop.sfrf %22
  %p24 = scmp.eq.s32.totalorder %s23, 0
  %p25 = pneg %p24
  %27 = shalt.err (%p25)

</llo_original>
